<compile_context>
chip_gen: v6e
topology: v6e:2x2x1
jax: 0.10.0
libtpu: 0.0.40
codegen_flags: <defaults>
</compile_context>

<pallas_src>
import jax
import jax.numpy as jnp
from jax.experimental import pallas as pl
from jax.experimental.pallas import tpu as pltpu


def _round_up(x: int, m: int) -> int:
    return ((x + m - 1) // m) * m


def _policy_kernel(state_ref, w1_ref, w2_ref, w3h_ref, wout_ref,
                   b1_ref, b2_ref, b3h_ref, obh_ref, out_ref):
    x = state_ref[...]                                            # [TB, S]

    # feature_net layers 1-2 (Linear -> ReLU) x2
    h = jnp.dot(x, w1_ref[...], preferred_element_type=jnp.float32) + b1_ref[...]
    h = jnp.maximum(h, 0.0)
    h = jnp.dot(h, w2_ref[...], preferred_element_type=jnp.float32) + b2_ref[...]
    h = jnp.maximum(h, 0.0)

    # fused: (feature_net layer 3) folded into (mean/log_std head layer 1)
    hh = jnp.dot(h, w3h_ref[...], preferred_element_type=jnp.float32) + b3h_ref[...]
    hh = jnp.maximum(hh, 0.0)                                     # [TB, 2H] = [m || s]

    # fused block-diagonal output projection -> lane-dense [TB, OUT_PAD]
    bout = obh_ref[0:1, :]                                        # row slices: lane-0 aligned
    lo = obh_ref[1:2, :]
    hi = obh_ref[2:3, :]
    out = jnp.dot(hh, wout_ref[...], preferred_element_type=jnp.float32) + bout
    # clamp: lo/hi are +-huge for mean & pad lanes, [-20, 2] for log_std lanes
    out = jnp.minimum(jnp.maximum(out, lo), hi)

    out_ref[...] = out


def fuse_params(p):
    """One-time algebraic fusion of the PyTorch-style parameter set."""
    H = p["w1"].shape[1]            # hidden_dim
    A = p["wm2"].shape[1]           # action_dim
    OUT_PAD = max(128, _round_up(2 * A, 128))   # lane-dense output width

    # fold feature_net layer 3 into both head first layers (exact algebra)
    wh = jnp.concatenate([p["wm1"], p["ws1"]], axis=1)            # [L, 2H]
    bh = jnp.concatenate([p["bm1"], p["bs1"]], axis=1)            # [1, 2H]
    w3h = p["w3"] @ wh                                            # [H, 2H]
    b3h = p["b3"] @ wh + bh                                       # [1, 2H]

    # block-diagonal output projection, zero-padded to OUT_PAD lanes
    wout = jnp.zeros((2 * H, OUT_PAD), jnp.float32)
    wout = wout.at[:H, :A].set(p["wm2"]).at[H:2 * H, A:2 * A].set(p["ws2"])
    bout = jnp.zeros((1, OUT_PAD), jnp.float32)
    bout = bout.at[:, :A].set(p["bm2"]).at[:, A:2 * A].set(p["bs2"])

    # per-lane clamp bounds: only log_std lanes are clamped to [-20, 2]
    BIG = 3.0e38
    lo = jnp.full((1, OUT_PAD), -BIG, jnp.float32).at[:, A:2 * A].set(-20.0)
    hi = jnp.full((1, OUT_PAD), BIG, jnp.float32).at[:, A:2 * A].set(2.0)
    obh = jnp.concatenate([bout, lo, hi], axis=0)                 # [3, OUT_PAD]

    return {
        "w1": p["w1"], "w2": p["w2"], "w3h": w3h, "wout": wout,
        "b1": p["b1"], "b2": p["b2"], "b3h": b3h, "obh": obh,
        "hidden_dim": int(H), "action_dim": int(A), "out_pad": int(OUT_PAD),
    }


def policy_forward(state, fp):
    """Fused PolicyNetwork.forward. Returns (mean [B,A], log_std [B,A])."""
    B, S = state.shape
    H = fp["hidden_dim"]
    A = fp["action_dim"]
    OUT_PAD = fp["out_pad"]

    operands = (state, fp["w1"], fp["w2"], fp["w3h"], fp["wout"],
                fp["b1"], fp["b2"], fp["b3h"], fp["obh"])

    flops = 2 * B * (S * H + H * H + H * 2 * H + 2 * H * OUT_PAD)
    bytes_accessed = 4 * (sum(int(op.size) for op in operands) + B * OUT_PAD)
    cost = pl.CostEstimate(flops=flops, transcendentals=0,
                           bytes_accessed=bytes_accessed)
    out_shape = jax.ShapeDtypeStruct((B, OUT_PAD), jnp.float32)

    GRIDLESS_MAX_B = 512   # below this, a single un-tiled invocation is cheapest
    MAX_TB = 2048          # per-step VMEM stays in the low-MB range at this tile

    if B > GRIDLESS_MAX_B:
        # keep the grid >= 2 so both v7x TensorCores get rows; amortize the
        # ~0.35us per-step pipeline overhead with a big batch tile.
        tb = min(MAX_TB, _round_up(pl.cdiv(B, 2), 8))
        grid = (pl.cdiv(B, tb),)   # ragged tail rows are masked on store
        full = lambda a: pl.BlockSpec(a.shape, lambda i: (0,) * a.ndim)
        out = pl.pallas_call(
            _policy_kernel,
            out_shape=out_shape,
            grid=grid,
            in_specs=[
                pl.BlockSpec((tb, S), lambda i: (i, 0)),
                full(fp["w1"]), full(fp["w2"]), full(fp["w3h"]), full(fp["wout"]),
                full(fp["b1"]), full(fp["b2"]), full(fp["b3h"]), full(fp["obh"]),
            ],
            out_specs=pl.BlockSpec((tb, OUT_PAD), lambda i: (i, 0)),
            compiler_params=pltpu.CompilerParams(
                dimension_semantics=("parallel",)),
            cost_estimate=cost,
        )(*operands)
    else:
        vmem = pl.BlockSpec(memory_space=pltpu.MemorySpace.VMEM)
        out = pl.pallas_call(
            _policy_kernel,
            out_shape=out_shape,
            in_specs=[vmem] * len(operands),
            out_specs=vmem,
            cost_estimate=cost,
        )(*operands)

    mean = out[:, :A]
    log_std = out[:, A:2 * A]
    return mean, log_std


def init_params(key, state_dim, action_dim, hidden_dim, latent_dim):
    """Deterministic synthetic parameters (PyTorch-Linear-shaped, stored [in, out])."""
    def linear(k, fan_in, fan_out):
        kw, kb = jax.random.split(k)
        bound = 1.0 / jnp.sqrt(fan_in)
        w = jax.random.uniform(kw, (fan_in, fan_out), jnp.float32, -bound, bound)
        b = jax.random.uniform(kb, (1, fan_out), jnp.float32, -bound, bound)
        return w, b

    keys = jax.random.split(key, 7)
    p = {}
    p["w1"], p["b1"] = linear(keys[0], state_dim, hidden_dim)
    p["w2"], p["b2"] = linear(keys[1], hidden_dim, hidden_dim)
    p["w3"], p["b3"] = linear(keys[2], hidden_dim, latent_dim)
    p["wm1"], p["bm1"] = linear(keys[3], latent_dim, hidden_dim)
    p["wm2"], p["bm2"] = linear(keys[4], hidden_dim, action_dim)
    p["ws1"], p["bs1"] = linear(keys[5], latent_dim, hidden_dim)
    p["ws2"], p["bs2"] = linear(keys[6], hidden_dim, action_dim)
    return p


def _reference_forward(state, p):
    """Pure-JAX reference of PolicyNetwork.forward (unfused) for correctness."""
    h = jnp.maximum(state @ p["w1"] + p["b1"], 0.0)
    h = jnp.maximum(h @ p["w2"] + p["b2"], 0.0)
    feat = h @ p["w3"] + p["b3"]
    m = jnp.maximum(feat @ p["wm1"] + p["bm1"], 0.0)
    mean = m @ p["wm2"] + p["bm2"]
    s = jnp.maximum(feat @ p["ws1"] + p["bs1"], 0.0)
    log_std = jnp.clip(s @ p["ws2"] + p["bs2"], -20.0, 2.0)
    return mean, log_std


if __name__ == "__main__":
    # Small shapes consistent with the module's forward: state [B, state_dim].
    B, STATE_DIM, ACTION_DIM, HIDDEN_DIM, LATENT_DIM = 8, 16, 8, 32, 32

    key = jax.random.PRNGKey(0)
    k_state, k_params, k_big = jax.random.split(key, 3)
    state = jax.random.normal(k_state, (B, STATE_DIM), jnp.float32)
    params = init_params(k_params, STATE_DIM, ACTION_DIM, HIDDEN_DIM, LATENT_DIM)

    fused = fuse_params(params)                 # one-time host-side fusion

    # Small-batch (gridless) path
    mean, log_std = policy_forward(state, fused)
    jax.block_until_ready((mean, log_std))
    ref_mean, ref_log_std = _reference_forward(state, params)
    assert mean.shape == (B, ACTION_DIM) and log_std.shape == (B, ACTION_DIM)
    assert jnp.allclose(mean, ref_mean, atol=1e-5, rtol=1e-5)
    assert jnp.allclose(log_std, ref_log_std, atol=1e-5, rtol=1e-5)

    # Larger ragged batch exercises the tiled, parallel-grid path (grid >= 2,
    # last block masked) used for rollout-sized batches.
    BB = 600
    state_big = jax.random.normal(k_big, (BB, STATE_DIM), jnp.float32)
    mean_b, log_std_b = policy_forward(state_big, fused)
    jax.block_until_ready((mean_b, log_std_b))
    ref_mean_b, ref_log_std_b = _reference_forward(state_big, params)
    assert jnp.allclose(mean_b, ref_mean_b, atol=1e-5, rtol=1e-5)
    assert jnp.allclose(log_std_b, ref_log_std_b, atol=1e-5, rtol=1e-5)

    print("KERNEL_OK")
</pallas_src>

<mosaic_0001>
module attributes {stable_mosaic.version = 11 : i64} {
  func.func @_policy_kernel(%arg0: memref<8x16xf32, #tpu.memory_space<vmem>>, %arg1: memref<16x32xf32, #tpu.memory_space<vmem>>, %arg2: memref<32x32xf32, #tpu.memory_space<vmem>>, %arg3: memref<32x64xf32, #tpu.memory_space<vmem>>, %arg4: memref<64x128xf32, #tpu.memory_space<vmem>>, %arg5: memref<1x32xf32, #tpu.memory_space<vmem>>, %arg6: memref<1x32xf32, #tpu.memory_space<vmem>>, %arg7: memref<1x64xf32, #tpu.memory_space<vmem>>, %arg8: memref<3x128xf32, #tpu.memory_space<vmem>>, %arg9: memref<8x128xf32, #tpu.memory_space<vmem>>) attributes {dimension_semantics = [], scalar_prefetch = 0 : i64, scratch_operands = 0 : i64, tpu.core_type = #tpu.core_type<tc>} {
    %c0 = arith.constant 0 : index
    %c0_0 = arith.constant 0 : index
    %0 = vector.load %arg0[%c0, %c0_0] : memref<8x16xf32, #tpu.memory_space<vmem>>, vector<8x16xf32>
    %c0_1 = arith.constant 0 : index
    %c0_2 = arith.constant 0 : index
    %1 = vector.load %arg1[%c0_1, %c0_2] : memref<16x32xf32, #tpu.memory_space<vmem>>, vector<16x32xf32>
    %cst = arith.constant dense<0.000000e+00> : vector<8x32xf32>
    %2 = tpu.matmul %0, %1, %cst {dimension_numbers = #tpu.dot_dimension_numbers<[1], [0], [0], [1], [0, 0, 1, 1], [], []>} : vector<8x16xf32>, vector<16x32xf32>, vector<8x32xf32> -> vector<8x32xf32>
    %c0_3 = arith.constant 0 : index
    %c0_4 = arith.constant 0 : index
    %3 = vector.load %arg5[%c0_3, %c0_4] : memref<1x32xf32, #tpu.memory_space<vmem>>, vector<1x32xf32>
    %4 = vector.broadcast %3 : vector<1x32xf32> to vector<8x32xf32>
    %5 = arith.addf %2, %4 : vector<8x32xf32>
    %cst_5 = arith.constant 0.000000e+00 : f32
    %6 = vector.broadcast %cst_5 : f32 to vector<8x32xf32>
    %7 = arith.maximumf %5, %6 : vector<8x32xf32>
    %c0_6 = arith.constant 0 : index
    %c0_7 = arith.constant 0 : index
    %8 = vector.load %arg2[%c0_6, %c0_7] : memref<32x32xf32, #tpu.memory_space<vmem>>, vector<32x32xf32>
    %cst_8 = arith.constant dense<0.000000e+00> : vector<8x32xf32>
    %9 = tpu.matmul %7, %8, %cst_8 {dimension_numbers = #tpu.dot_dimension_numbers<[1], [0], [0], [1], [0, 0, 1, 1], [], []>} : vector<8x32xf32>, vector<32x32xf32>, vector<8x32xf32> -> vector<8x32xf32>
    %c0_9 = arith.constant 0 : index
    %c0_10 = arith.constant 0 : index
    %10 = vector.load %arg6[%c0_9, %c0_10] : memref<1x32xf32, #tpu.memory_space<vmem>>, vector<1x32xf32>
    %11 = vector.broadcast %10 : vector<1x32xf32> to vector<8x32xf32>
    %12 = arith.addf %9, %11 : vector<8x32xf32>
    %cst_11 = arith.constant 0.000000e+00 : f32
    %13 = vector.broadcast %cst_11 : f32 to vector<8x32xf32>
    %14 = arith.maximumf %12, %13 : vector<8x32xf32>
    %c0_12 = arith.constant 0 : index
    %c0_13 = arith.constant 0 : index
    %15 = vector.load %arg3[%c0_12, %c0_13] : memref<32x64xf32, #tpu.memory_space<vmem>>, vector<32x64xf32>
    %cst_14 = arith.constant dense<0.000000e+00> : vector<8x64xf32>
    %16 = tpu.matmul %14, %15, %cst_14 {dimension_numbers = #tpu.dot_dimension_numbers<[1], [0], [0], [1], [0, 0, 1, 1], [], []>} : vector<8x32xf32>, vector<32x64xf32>, vector<8x64xf32> -> vector<8x64xf32>
    %c0_15 = arith.constant 0 : index
    %c0_16 = arith.constant 0 : index
    %17 = vector.load %arg7[%c0_15, %c0_16] : memref<1x64xf32, #tpu.memory_space<vmem>>, vector<1x64xf32>
    %18 = vector.broadcast %17 : vector<1x64xf32> to vector<8x64xf32>
    %19 = arith.addf %16, %18 : vector<8x64xf32>
    %cst_17 = arith.constant 0.000000e+00 : f32
    %20 = vector.broadcast %cst_17 : f32 to vector<8x64xf32>
    %21 = arith.maximumf %19, %20 : vector<8x64xf32>
    %c0_18 = arith.constant 0 : index
    %c0_19 = arith.constant 0 : index
    %22 = vector.load %arg8[%c0_18, %c0_19] : memref<3x128xf32, #tpu.memory_space<vmem>>, vector<1x128xf32>
    %c1 = arith.constant 1 : index
    %c0_20 = arith.constant 0 : index
    %23 = vector.load %arg8[%c1, %c0_20] : memref<3x128xf32, #tpu.memory_space<vmem>>, vector<1x128xf32>
    %c2 = arith.constant 2 : index
    %c0_21 = arith.constant 0 : index
    %24 = vector.load %arg8[%c2, %c0_21] : memref<3x128xf32, #tpu.memory_space<vmem>>, vector<1x128xf32>
    %c0_22 = arith.constant 0 : index
    %c0_23 = arith.constant 0 : index
    %25 = vector.load %arg4[%c0_22, %c0_23] : memref<64x128xf32, #tpu.memory_space<vmem>>, vector<64x128xf32>
    %cst_24 = arith.constant dense<0.000000e+00> : vector<8x128xf32>
    %26 = tpu.matmul %21, %25, %cst_24 {dimension_numbers = #tpu.dot_dimension_numbers<[1], [0], [0], [1], [0, 0, 1, 1], [], []>} : vector<8x64xf32>, vector<64x128xf32>, vector<8x128xf32> -> vector<8x128xf32>
    %27 = vector.broadcast %22 : vector<1x128xf32> to vector<8x128xf32>
    %28 = arith.addf %26, %27 : vector<8x128xf32>
    %29 = vector.broadcast %23 : vector<1x128xf32> to vector<8x128xf32>
    %30 = arith.maximumf %28, %29 : vector<8x128xf32>
    %31 = vector.broadcast %24 : vector<1x128xf32> to vector<8x128xf32>
    %32 = arith.minimumf %30, %31 : vector<8x128xf32>
    %c0_25 = arith.constant 0 : index
    %c0_26 = arith.constant 0 : index
    %33 = vector.load %arg9[%c0_25, %c0_26] : memref<8x128xf32, #tpu.memory_space<vmem>>, vector<8x128xf32>
    tpu.vector_store %arg9[%c0_25, %c0_26], %32 {strides = array<i32>} : memref<8x128xf32, #tpu.memory_space<vmem>>, vector<8x128xf32>,
    return
  }
}

</mosaic_0001>

<llo_original>
// kernel: tpu_custom_call.1
$region0: #{tpu_custom_call.1}
  #allocation0 [shape = 'u32[]', space=smem, size = 0x4, offset = 0x4, fixed_abs, tag = 'smem constant byte address 0x4 - core index']
  #allocation1 [shape = 'u32[144,128]{1,0:T(1,128)}', space=vmem, size = 0x12000, scoped, tag = 'internal scratch']
  %s0 = inlined_call_operand.hbm [shape: f32[8,16], index: 0, kind: input, shape index: {}]
  %s1 = inlined_call_operand.hbm [shape: f32[16,32], index: 1, kind: input, shape index: {}]
  %s2 = inlined_call_operand.hbm [shape: f32[32,32], index: 2, kind: input, shape index: {}]
  %s3 = inlined_call_operand.hbm [shape: f32[32,64], index: 3, kind: input, shape index: {}]
  %s4 = inlined_call_operand.hbm [shape: f32[64,128], index: 4, kind: input, shape index: {}]
  %s5 = inlined_call_operand.vmem [shape: f32[1,32], index: 5, kind: input, shape index: {}]
  %s6 = inlined_call_operand.vmem [shape: f32[1,32], index: 6, kind: input, shape index: {}]
  %s7 = inlined_call_operand.vmem [shape: f32[1,64], index: 7, kind: input, shape index: {}]
  %s8 = inlined_call_operand.vmem [shape: f32[3,128], index: 8, kind: input, shape index: {}]
  %s9 = inlined_call_operand.hbm [shape: f32[8,128], index: 9, kind: output, shape index: {}]
  %s10 = sld [smem:[#allocation0]]
  $region66: #{tpu_custom_call.1} parent=0
    _
  %s12 = ssub.s32 1, %s10
  %s13 = scalar_select 0, %s12, %s10
  $region1: #{tpu_custom_call.1} parent=0
    #allocation2 [shape = 'u8[4096]{0}', space=vmem, size = 0x1000, scoped, tag = 'input window, operand 0, single buffered']
    #allocation3 [shape = 's32[1]{0}', space=sflag, size = 0x4, scoped, tag = 'scoped memory for tpu_custom_call.1']
    #allocation4 [shape = 's32[1]{0}', space=sflag, size = 0x4, scoped, tag = 'scoped memory for tpu_custom_call.1']
    #allocation5 [shape = 'u8[8192]{0}', space=vmem, size = 0x2000, scoped, tag = 'input window, operand 1, single buffered']
    #allocation6 [shape = 's32[1]{0}', space=sflag, size = 0x4, scoped, tag = 'scoped memory for tpu_custom_call.1']
    #allocation7 [shape = 'u8[16384]{0}', space=vmem, size = 0x4000, scoped, tag = 'input window, operand 2, single buffered']
    #allocation8 [shape = 'u8[16384]{0}', space=vmem, size = 0x4000, scoped, tag = 'input window, operand 3, single buffered']
    #allocation9 [shape = 's32[1]{0}', space=sflag, size = 0x4, scoped, tag = 'scoped memory for tpu_custom_call.1']
    #allocation10 [shape = 'u8[32768]{0}', space=vmem, size = 0x8000, scoped, tag = 'input window, operand 4, single buffered']
    #allocation11 [shape = 'u8[4096]{0}', space=vmem, size = 0x1000, scoped, tag = 'output window, operand 0, single buffered']
    %14 = vsyncpa [#allocation3], 0
    %15 = vsyncpa [#allocation6], 0
    %16 = vsyncpa [#allocation9], 0
    %17 = vsyncpa [#allocation4], 0
    // Predicated region
    $region2: #{tpu_custom_call.1} parent=1 // pred_check
      _
    $region3: #{tpu_custom_call.1} parent=1 // pred_check_branch
      %19 = sbr.rel (0) target = $region5
    $region4: #{tpu_custom_call.1} parent=1 // pred_region
      %s21 = ssub.s32 128, 128
      %22 = vsyncadd [#allocation3], %s21
      %s24 = sshll.u32 [#allocation2], 4
      %s25 = int_to_ptr.vmem [resolvable:$true] %s24
      %27 = dma.hbm_to_vmem [thread:$0]  %s0, 128, %s25, [#allocation3]
    $region5: #{tpu_custom_call.1} parent=1 // pred_fallthru
      _
    // Predicated region
    $region6: #{tpu_custom_call.1} parent=1 // pred_check
      _
    $region7: #{tpu_custom_call.1} parent=1 // pred_check_branch
      %29 = sbr.rel (0) target = $region9
    $region8: #{tpu_custom_call.1} parent=1 // pred_region
      %s31 = ssub.s32 256, 256
      %32 = vsyncadd [#allocation6], %s31
      %s33 = sshll.u32 [#allocation5], 4
      %s34 = int_to_ptr.vmem [resolvable:$true] %s33
      %39 = dma.hbm_to_vmem [thread:$0]  %s1, 256, %s34, [#allocation6], 128, 128, 8
    $region9: #{tpu_custom_call.1} parent=1 // pred_fallthru
      _
    // Predicated region
    $region10: #{tpu_custom_call.1} parent=1 // pred_check
      _
    $region11: #{tpu_custom_call.1} parent=1 // pred_check_branch
      %41 = sbr.rel (0) target = $region13
    $region12: #{tpu_custom_call.1} parent=1 // pred_region
      %s43 = ssub.s32 512, 512
      %44 = vsyncadd [#allocation6], %s43
      %s45 = sshll.u32 [#allocation7], 4
      %s46 = int_to_ptr.vmem [resolvable:$true] %s45
      %51 = dma.hbm_to_vmem [thread:$0]  %s2, 512, %s46, [#allocation6], 128, 128, 8
    $region13: #{tpu_custom_call.1} parent=1 // pred_fallthru
      _
    // Predicated region
    $region14: #{tpu_custom_call.1} parent=1 // pred_check
      _
    $region15: #{tpu_custom_call.1} parent=1 // pred_check_branch
      %53 = sbr.rel (0) target = $region17
    $region16: #{tpu_custom_call.1} parent=1 // pred_region
      %s55 = ssub.s32 512, 512
      %56 = vsyncadd [#allocation9], %s55
      %s57 = sshll.u32 [#allocation8], 4
      %s58 = int_to_ptr.vmem [resolvable:$true] %s57
      %63 = dma.hbm_to_vmem [thread:$0]  %s3, 512, %s58, [#allocation9], 128, 128, 8
    $region17: #{tpu_custom_call.1} parent=1 // pred_fallthru
      _
    // Predicated region
    $region18: #{tpu_custom_call.1} parent=1 // pred_check
      _
    $region19: #{tpu_custom_call.1} parent=1 // pred_check_branch
      %65 = sbr.rel (0) target = $region21
    $region20: #{tpu_custom_call.1} parent=1 // pred_region
      %s67 = ssub.s32 1024, 1024
      %68 = vsyncadd [#allocation9], %s67
      %s69 = sshll.u32 [#allocation10], 4
      %s70 = int_to_ptr.vmem [resolvable:$true] %s69
      %75 = dma.hbm_to_vmem [thread:$0]  %s4, 1024, %s70, [#allocation9], 128, 128, 8
    $region21: #{tpu_custom_call.1} parent=1 // pred_fallthru
      _
    // Predicated region
    $region22: #{tpu_custom_call.1} parent=1 // pred_check
      _
    $region23: #{tpu_custom_call.1} parent=1 // pred_check_branch
      %77 = sbr.rel (0) target = $region25
    $region24: #{tpu_custom_call.1} parent=1 // pred_region
      _
    $region25: #{tpu_custom_call.1} parent=1 // pred_fallthru
      _
    // Predicated region
    $region26: #{tpu_custom_call.1} parent=1 // pred_check
      _
    $region27: #{tpu_custom_call.1} parent=1 // pred_check_branch
      %79 = sbr.rel (0) target = $region29
    $region28: #{tpu_custom_call.1} parent=1 // pred_region
      _
    $region29: #{tpu_custom_call.1} parent=1 // pred_fallthru
      _
    // Predicated region
    $region30: #{tpu_custom_call.1} parent=1 // pred_check
      _
    $region31: #{tpu_custom_call.1} parent=1 // pred_check_branch
      %81 = sbr.rel (0) target = $region33
    $region32: #{tpu_custom_call.1} parent=1 // pred_region
      _
    $region33: #{tpu_custom_call.1} parent=1 // pred_fallthru
      _
    // Predicated region
    $region34: #{tpu_custom_call.1} parent=1 // pred_check
      _
    $region35: #{tpu_custom_call.1} parent=1 // pred_check_branch
      %83 = sbr.rel (0) target = $region37
    $region36: #{tpu_custom_call.1} parent=1 // pred_region
      _
    $region37: #{tpu_custom_call.1} parent=1 // pred_fallthru
      _
    // Predicated region
    $region38: #{tpu_custom_call.1} parent=1 // pred_check
      _
    $region39: #{tpu_custom_call.1} parent=1 // pred_check_branch
      %85 = sbr.rel (0) target = $region41
    $region40: #{tpu_custom_call.1} parent=1 // pred_region
      %86 = dma.done [#allocation3], 128
    $region41: #{tpu_custom_call.1} parent=1 // pred_fallthru
      _
    // Predicated region
    $region42: #{tpu_custom_call.1} parent=1 // pred_check
      _
    $region43: #{tpu_custom_call.1} parent=1 // pred_check_branch
      %88 = sbr.rel (0) target = $region45
    $region44: #{tpu_custom_call.1} parent=1 // pred_region
      %89 = dma.done [#allocation6], 256
    $region45: #{tpu_custom_call.1} parent=1 // pred_fallthru
      _
    // Predicated region
    $region46: #{tpu_custom_call.1} parent=1 // pred_check
      _
    $region47: #{tpu_custom_call.1} parent=1 // pred_check_branch
      %91 = sbr.rel (0) target = $region49
    $region48: #{tpu_custom_call.1} parent=1 // pred_region
      %92 = dma.done [#allocation6], 512
    $region49: #{tpu_custom_call.1} parent=1 // pred_fallthru
      _
    // Predicated region
    $region50: #{tpu_custom_call.1} parent=1 // pred_check
      _
    $region51: #{tpu_custom_call.1} parent=1 // pred_check_branch
      %94 = sbr.rel (0) target = $region53
    $region52: #{tpu_custom_call.1} parent=1 // pred_region
      %95 = dma.done [#allocation9], 512
    $region53: #{tpu_custom_call.1} parent=1 // pred_fallthru
      _
    // Predicated region
    $region54: #{tpu_custom_call.1} parent=1 // pred_check
      _
    $region55: #{tpu_custom_call.1} parent=1 // pred_check_branch
      %97 = sbr.rel (0) target = $region57
    $region56: #{tpu_custom_call.1} parent=1 // pred_region
      %98 = dma.done [#allocation9], 1024
    $region57: #{tpu_custom_call.1} parent=1 // pred_fallthru
      _
    %v99 = vld [vmem:[#allocation2] sm:$0xff]
    %v100 = vld [vmem:[#allocation5] sm:$0xff]
    %v101 = vld [vmem:[#allocation5 + $0x8] sm:$0xff]
    %v102 = vld [vmem:[%s5] sm:$0x1]
    %v104 = vlaneseq
    %v105 = vshrl.u32 %v104, 7
    %v106 = vsub.s32 0, %v105
    %v107 = vrot.slane %v102, %v106
    %vm109 = vcmask 130048
    %v111 = vsel %vm109, %v99, 0
    %113 = vmatprep.subr.mxu0 0.0
    %114 = vmatpush1.msra.mxu0 0.0
    %115 = vmatprep.subr.mxu0 0.0
    %116 = vmatpush1.msra.mxu0 0.0
    %117 = vmatprep.subr.mxu0 0.0
    %118 = vmatpush1.msra.mxu0 0.0
    %119 = vmatprep.subr.mxu0 0.0
    %120 = vmatpush1.msra.mxu0 0.0
    %121 = vmatprep.subr.mxu0 0.0
    %122 = vmatpush1.msra.mxu0 0.0
    %123 = vmatprep.subr.mxu0 0.0
    %124 = vmatpush1.msra.mxu0 0.0
    %125 = vmatprep.subr.mxu0 0.0
    %126 = vmatpush1.msra.mxu0 0.0
    %127 = vmatprep.subr.mxu0 0.0
    %128 = vmatpush1.msra.mxu0 0.0
    %129 = vmatprep.subr.mxu0 0.0
    %130 = vmatpush1.msra.mxu0 0.0
    %131 = vmatprep.subr.mxu0 0.0
    %132 = vmatpush1.msra.mxu0 0.0
    %133 = vmatprep.subr.mxu0 0.0
    %134 = vmatpush1.msra.mxu0 0.0
    %135 = vmatprep.subr.mxu0 0.0
    %136 = vmatpush1.msra.mxu0 0.0
    %137 = vmatprep.subr.mxu0 0.0
    %138 = vmatpush1.msra.mxu0 0.0
    %139 = vmatprep.subr.mxu0 0.0
    %140 = vmatpush1.msra.mxu0 0.0
    %141 = vmatprep.subr.mxu0 0.0
    %142 = vmatpush1.msra.mxu0 %v101
    %143 = vmatprep.subr.mxu0 0.0
    %144 = vmatpush1.msra.mxu0 %v100
    %145 = vmatprep.subr.mxu0 0.0
    %146 = vmatpush2.msra.mxu0 0.0
    %147 = vmatprep.subr.mxu0 0.0
    %148 = vmatpush2.msra.mxu0 0.0
    %149 = vmatprep.subr.mxu0 0.0
    %150 = vmatpush2.msra.mxu0 0.0
    %151 = vmatprep.subr.mxu0 0.0
    %152 = vmatpush2.msra.mxu0 0.0
    %153 = vmatprep.subr.mxu0 0.0
    %154 = vmatpush2.msra.mxu0 0.0
    %155 = vmatprep.subr.mxu0 0.0
    %156 = vmatpush2.msra.mxu0 0.0
    %157 = vmatprep.subr.mxu0 0.0
    %158 = vmatpush2.msra.mxu0 0.0
    %159 = vmatprep.subr.mxu0 0.0
    %160 = vmatpush2.msra.mxu0 0.0
    %161 = vmatprep.subr.mxu0 0.0
    %162 = vmatpush2.msra.mxu0 0.0
    %163 = vmatprep.subr.mxu0 0.0
    %164 = vmatpush2.msra.mxu0 0.0
    %165 = vmatprep.subr.mxu0 0.0
    %166 = vmatpush2.msra.mxu0 0.0
    %167 = vmatprep.subr.mxu0 0.0
    %168 = vmatpush2.msra.mxu0 0.0
    %169 = vmatprep.subr.mxu0 0.0
    %170 = vmatpush2.msra.mxu0 0.0
    %171 = vmatprep.subr.mxu0 0.0
    %172 = vmatpush2.msra.mxu0 0.0
    %173 = vmatprep.subr.mxu0 0.0
    %174 = vmatpush2.msra.mxu0 0.0
    %175 = vmatprep.subr.mxu0 0.0
    %176 = vmatpush2.msra.mxu0 0.0
    %177 = vmatprep.mubr.f32.mxu0 0.0
    %178 = vmatmul.mubr.f32.gmra.mxu0 %v111
    %v179 = vpop.f32.mrf.mxu0
    %v180 = vadd.f32 %v107, %v179
    %v181 = vpop.f32.mrf.mxu0
    %182 = vdwg.mxu0
    %v183 = vmax.f32 %v180, 0.0
    %v184 = vld [vmem:[#allocation7] sm:$0xff]
    %v185 = vld [vmem:[#allocation7 + $0x8] sm:$0xff]
    %v186 = vld [vmem:[#allocation7 + $0x10] sm:$0xff]
    %v187 = vld [vmem:[#allocation7 + $0x18] sm:$0xff]
    %v188 = vld [vmem:[%s6] sm:$0x1]
    %v190 = vlaneseq
    %v191 = vshrl.u32 %v190, 7
    %v192 = vsub.s32 0, %v191
    %v193 = vrot.slane %v188, %v192
    %vm195 = vcmask 261120
    %v197 = vsel %vm195, %v183, 0
    %199 = vmatprep.subr.mxu0 0.0
    %200 = vmatpush1.msra.mxu0 0.0
    %201 = vmatprep.subr.mxu0 0.0
    %202 = vmatpush1.msra.mxu0 0.0
    %203 = vmatprep.subr.mxu0 0.0
    %204 = vmatpush1.msra.mxu0 0.0
    %205 = vmatprep.subr.mxu0 0.0
    %206 = vmatpush1.msra.mxu0 0.0
    %207 = vmatprep.subr.mxu0 0.0
    %208 = vmatpush1.msra.mxu0 0.0
    %209 = vmatprep.subr.mxu0 0.0
    %210 = vmatpush1.msra.mxu0 0.0
    %211 = vmatprep.subr.mxu0 0.0
    %212 = vmatpush1.msra.mxu0 0.0
    %213 = vmatprep.subr.mxu0 0.0
    %214 = vmatpush1.msra.mxu0 0.0
    %215 = vmatprep.subr.mxu0 0.0
    %216 = vmatpush1.msra.mxu0 0.0
    %217 = vmatprep.subr.mxu0 0.0
    %218 = vmatpush1.msra.mxu0 0.0
    %219 = vmatprep.subr.mxu0 0.0
    %220 = vmatpush1.msra.mxu0 0.0
    %221 = vmatprep.subr.mxu0 0.0
    %222 = vmatpush1.msra.mxu0 0.0
    %223 = vmatprep.subr.mxu0 0.0
    %224 = vmatpush1.msra.mxu0 %v187
    %225 = vmatprep.subr.mxu0 0.0
    %226 = vmatpush1.msra.mxu0 %v186
    %227 = vmatprep.subr.mxu0 0.0
    %228 = vmatpush1.msra.mxu0 %v185
    %229 = vmatprep.subr.mxu0 0.0
    %230 = vmatpush1.msra.mxu0 %v184
    %231 = vmatprep.subr.mxu0 0.0
    %232 = vmatpush2.msra.mxu0 0.0
    %233 = vmatprep.subr.mxu0 0.0
    %234 = vmatpush2.msra.mxu0 0.0
    %235 = vmatprep.subr.mxu0 0.0
    %236 = vmatpush2.msra.mxu0 0.0
    %237 = vmatprep.subr.mxu0 0.0
    %238 = vmatpush2.msra.mxu0 0.0
    %239 = vmatprep.subr.mxu0 0.0
    %240 = vmatpush2.msra.mxu0 0.0
    %241 = vmatprep.subr.mxu0 0.0
    %242 = vmatpush2.msra.mxu0 0.0
    %243 = vmatprep.subr.mxu0 0.0
    %244 = vmatpush2.msra.mxu0 0.0
    %245 = vmatprep.subr.mxu0 0.0
    %246 = vmatpush2.msra.mxu0 0.0
    %247 = vmatprep.subr.mxu0 0.0
    %248 = vmatpush2.msra.mxu0 0.0
    %249 = vmatprep.subr.mxu0 0.0
    %250 = vmatpush2.msra.mxu0 0.0
    %251 = vmatprep.subr.mxu0 0.0
    %252 = vmatpush2.msra.mxu0 0.0
    %253 = vmatprep.subr.mxu0 0.0
    %254 = vmatpush2.msra.mxu0 0.0
    %255 = vmatprep.subr.mxu0 0.0
    %256 = vmatpush2.msra.mxu0 0.0
    %257 = vmatprep.subr.mxu0 0.0
    %258 = vmatpush2.msra.mxu0 0.0
    %259 = vmatprep.subr.mxu0 0.0
    %260 = vmatpush2.msra.mxu0 0.0
    %261 = vmatprep.subr.mxu0 0.0
    %262 = vmatpush2.msra.mxu0 0.0
    %263 = vmatprep.mubr.f32.mxu0 0.0
    %264 = vmatmul.mubr.f32.gmra.mxu0 %v197
    %v265 = vpop.f32.mrf.mxu0
    %v266 = vadd.f32 %v193, %v265
    %v267 = vpop.f32.mrf.mxu0
    %268 = vdwg.mxu0
    %v269 = vmax.f32 %v266, 0.0
    %v270 = vld [vmem:[#allocation8] sm:$0xff]
    %v271 = vld [vmem:[#allocation8 + $0x8] sm:$0xff]
    %v272 = vld [vmem:[#allocation8 + $0x10] sm:$0xff]
    %v273 = vld [vmem:[#allocation8 + $0x18] sm:$0xff]
    %v274 = vld [vmem:[%s7] sm:$0x1]
    %v276 = vlaneseq
    %v277 = vshrl.u32 %v276, 7
    %v278 = vsub.s32 0, %v277
    %v279 = vrot.slane %v274, %v278
    %v282 = vsel %vm195, %v269, 0
    %284 = vmatprep.subr.mxu0 0.0
    %285 = vmatpush1.msra.mxu0 0.0
    %286 = vmatprep.subr.mxu0 0.0
    %287 = vmatpush1.msra.mxu0 0.0
    %288 = vmatprep.subr.mxu0 0.0
    %289 = vmatpush1.msra.mxu0 0.0
    %290 = vmatprep.subr.mxu0 0.0
    %291 = vmatpush1.msra.mxu0 0.0
    %292 = vmatprep.subr.mxu0 0.0
    %293 = vmatpush1.msra.mxu0 0.0
    %294 = vmatprep.subr.mxu0 0.0
    %295 = vmatpush1.msra.mxu0 0.0
    %296 = vmatprep.subr.mxu0 0.0
    %297 = vmatpush1.msra.mxu0 0.0
    %298 = vmatprep.subr.mxu0 0.0
    %299 = vmatpush1.msra.mxu0 0.0
    %300 = vmatprep.subr.mxu0 0.0
    %301 = vmatpush1.msra.mxu0 0.0
    %302 = vmatprep.subr.mxu0 0.0
    %303 = vmatpush1.msra.mxu0 0.0
    %304 = vmatprep.subr.mxu0 0.0
    %305 = vmatpush1.msra.mxu0 0.0
    %306 = vmatprep.subr.mxu0 0.0
    %307 = vmatpush1.msra.mxu0 0.0
    %308 = vmatprep.subr.mxu0 0.0
    %309 = vmatpush1.msra.mxu0 %v273
    %310 = vmatprep.subr.mxu0 0.0
    %311 = vmatpush1.msra.mxu0 %v272
    %312 = vmatprep.subr.mxu0 0.0
    %313 = vmatpush1.msra.mxu0 %v271
    %314 = vmatprep.subr.mxu0 0.0
    %315 = vmatpush1.msra.mxu0 %v270
    %316 = vmatprep.subr.mxu0 0.0
    %317 = vmatpush2.msra.mxu0 0.0
    %318 = vmatprep.subr.mxu0 0.0
    %319 = vmatpush2.msra.mxu0 0.0
    %320 = vmatprep.subr.mxu0 0.0
    %321 = vmatpush2.msra.mxu0 0.0
    %322 = vmatprep.subr.mxu0 0.0
    %323 = vmatpush2.msra.mxu0 0.0
    %324 = vmatprep.subr.mxu0 0.0
    %325 = vmatpush2.msra.mxu0 0.0
    %326 = vmatprep.subr.mxu0 0.0
    %327 = vmatpush2.msra.mxu0 0.0
    %328 = vmatprep.subr.mxu0 0.0
    %329 = vmatpush2.msra.mxu0 0.0
    %330 = vmatprep.subr.mxu0 0.0
    %331 = vmatpush2.msra.mxu0 0.0
    %332 = vmatprep.subr.mxu0 0.0
    %333 = vmatpush2.msra.mxu0 0.0
    %334 = vmatprep.subr.mxu0 0.0
    %335 = vmatpush2.msra.mxu0 0.0
    %336 = vmatprep.subr.mxu0 0.0
    %337 = vmatpush2.msra.mxu0 0.0
    %338 = vmatprep.subr.mxu0 0.0
    %339 = vmatpush2.msra.mxu0 0.0
    %340 = vmatprep.subr.mxu0 0.0
    %341 = vmatpush2.msra.mxu0 0.0
    %342 = vmatprep.subr.mxu0 0.0
    %343 = vmatpush2.msra.mxu0 0.0
    %344 = vmatprep.subr.mxu0 0.0
    %345 = vmatpush2.msra.mxu0 0.0
    %346 = vmatprep.subr.mxu0 0.0
    %347 = vmatpush2.msra.mxu0 0.0
    %348 = vmatprep.mubr.f32.mxu0 0.0
    %349 = vmatmul.mubr.f32.gmra.mxu0 %v282
    %v350 = vpop.f32.mrf.mxu0
    %v351 = vadd.f32 %v279, %v350
    %v352 = vpop.f32.mrf.mxu0
    %353 = vdwg.mxu0
    %v354 = vmax.f32 %v351, 0.0
    %v355 = vld [vmem:[%s8] sm:$0x1]
    %v356 = vld [vmem:[%s8 + $0x1] sm:$0x1]
    %v357 = vld [vmem:[%s8 + $0x2] sm:$0x1]
    %v358 = vld [vmem:[#allocation10] sm:$0xff]
    %v359 = vld [vmem:[#allocation10 + $0x8] sm:$0xff]
    %v360 = vld [vmem:[#allocation10 + $0x10] sm:$0xff]
    %v361 = vld [vmem:[#allocation10 + $0x18] sm:$0xff]
    %v362 = vld [vmem:[#allocation10 + $0x20] sm:$0xff]
    %v363 = vld [vmem:[#allocation10 + $0x28] sm:$0xff]
    %v364 = vld [vmem:[#allocation10 + $0x30] sm:$0xff]
    %v365 = vld [vmem:[#allocation10 + $0x38] sm:$0xff]
    %v366 = vlaneseq
    %v367 = vshrl.u32 %v366, 7
    %v368 = vsub.s32 0, %v367
    %v369 = vrot.slane %v355, %v368
    %vm370 = vcmask 523264
    %v372 = vsel %vm370, %v354, 0
    %374 = vmatprep.subr.mxu0 0.0
    %375 = vmatpush1.msra.mxu0 0.0
    %376 = vmatprep.subr.mxu0 0.0
    %377 = vmatpush1.msra.mxu0 0.0
    %378 = vmatprep.subr.mxu0 0.0
    %379 = vmatpush1.msra.mxu0 0.0
    %380 = vmatprep.subr.mxu0 0.0
    %381 = vmatpush1.msra.mxu0 0.0
    %382 = vmatprep.subr.mxu0 0.0
    %383 = vmatpush1.msra.mxu0 0.0
    %384 = vmatprep.subr.mxu0 0.0
    %385 = vmatpush1.msra.mxu0 0.0
    %386 = vmatprep.subr.mxu0 0.0
    %387 = vmatpush1.msra.mxu0 0.0
    %388 = vmatprep.subr.mxu0 0.0
    %389 = vmatpush1.msra.mxu0 0.0
    %390 = vmatprep.subr.mxu0 0.0
    %391 = vmatpush1.msra.mxu0 %v365
    %392 = vmatprep.subr.mxu0 0.0
    %393 = vmatpush1.msra.mxu0 %v364
    %394 = vmatprep.subr.mxu0 0.0
    %395 = vmatpush1.msra.mxu0 %v363
    %396 = vmatprep.subr.mxu0 0.0
    %397 = vmatpush1.msra.mxu0 %v362
    %398 = vmatprep.subr.mxu0 0.0
    %399 = vmatpush1.msra.mxu0 %v361
    %400 = vmatprep.subr.mxu0 0.0
    %401 = vmatpush1.msra.mxu0 %v360
    %402 = vmatprep.subr.mxu0 0.0
    %403 = vmatpush1.msra.mxu0 %v359
    %404 = vmatprep.subr.mxu0 0.0
    %405 = vmatpush1.msra.mxu0 %v358
    %406 = vmatprep.subr.mxu0 0.0
    %407 = vmatpush2.msra.mxu0 0.0
    %408 = vmatprep.subr.mxu0 0.0
    %409 = vmatpush2.msra.mxu0 0.0
    %410 = vmatprep.subr.mxu0 0.0
    %411 = vmatpush2.msra.mxu0 0.0
    %412 = vmatprep.subr.mxu0 0.0
    %413 = vmatpush2.msra.mxu0 0.0
    %414 = vmatprep.subr.mxu0 0.0
    %415 = vmatpush2.msra.mxu0 0.0
    %416 = vmatprep.subr.mxu0 0.0
    %417 = vmatpush2.msra.mxu0 0.0
    %418 = vmatprep.subr.mxu0 0.0
    %419 = vmatpush2.msra.mxu0 0.0
    %420 = vmatprep.subr.mxu0 0.0
    %421 = vmatpush2.msra.mxu0 0.0
    %422 = vmatprep.subr.mxu0 0.0
    %423 = vmatpush2.msra.mxu0 0.0
    %424 = vmatprep.subr.mxu0 0.0
    %425 = vmatpush2.msra.mxu0 0.0
    %426 = vmatprep.subr.mxu0 0.0
    %427 = vmatpush2.msra.mxu0 0.0
    %428 = vmatprep.subr.mxu0 0.0
    %429 = vmatpush2.msra.mxu0 0.0
    %430 = vmatprep.subr.mxu0 0.0
    %431 = vmatpush2.msra.mxu0 0.0
    %432 = vmatprep.subr.mxu0 0.0
    %433 = vmatpush2.msra.mxu0 0.0
    %434 = vmatprep.subr.mxu0 0.0
    %435 = vmatpush2.msra.mxu0 0.0
    %436 = vmatprep.subr.mxu0 0.0
    %437 = vmatpush2.msra.mxu0 0.0
    %438 = vmatprep.mubr.f32.mxu0 0.0
    %439 = vmatmul.mubr.f32.gmra.mxu0 %v372
    %v440 = vpop.f32.mrf.mxu0
    %v441 = vadd.f32 %v369, %v440
    %v442 = vpop.f32.mrf.mxu0
    %443 = vdwg.mxu0
    %v444 = vlaneseq
    %v445 = vshrl.u32 %v444, 7
    %v446 = vsub.s32 0, %v445
    %v447 = vrot.slane %v356, %v446
    %v448 = vmax.f32 %v441, %v447
    %v449 = vlaneseq
    %v450 = vshrl.u32 %v449, 7
    %v451 = vsub.s32 0, %v450
    %v452 = vrot.slane %v357, %v451
    %v453 = vmin.f32 %v448, %v452
    %454 = vst [vmem:[#allocation11] sm:$0xff] %v453
    // Predicated region
    $region58: #{tpu_custom_call.1} parent=1 // pred_check
      _
    $region59: #{tpu_custom_call.1} parent=1 // pred_check_branch
      %456 = sbr.rel (0) target = $region61
    $region60: #{tpu_custom_call.1} parent=1 // pred_region
      %s458 = ssub.s32 128, 128
      %459 = vsyncadd [#allocation4], %s458
      %s461 = sshll.u32 [#allocation11], 4
      %s462 = int_to_ptr.vmem [resolvable:$true] %s461
      %464 = dma.vmem_to_hbm [thread:$0]  %s462, 128, %s9, [#allocation4]
    $region61: #{tpu_custom_call.1} parent=1 // pred_fallthru
      _
    // Predicated region
    $region62: #{tpu_custom_call.1} parent=1 // pred_check
      _
    $region63: #{tpu_custom_call.1} parent=1 // pred_check_branch
      %466 = sbr.rel (0) target = $region65
    $region64: #{tpu_custom_call.1} parent=1 // pred_region
      %467 = dma.done [#allocation4], 128
    $region65: #{tpu_custom_call.1} parent=1 // pred_fallthru
      _
    %468 = vsyncpa [#allocation3], 1
    %469 = vsyncpa [#allocation6], 1
    %470 = vsyncpa [#allocation9], 1
    %471 = vsyncpa [#allocation4], 1

</llo_original>
